<compile_context>
chip_gen: v7x
topology: tpu7x:2x2x1
jax: 0.10.0
libtpu: 0.0.40
codegen_flags: <defaults>
</compile_context>

<pallas_src>
import jax
import jax.numpy as jnp
from jax.experimental import pallas as pl
from jax.experimental.pallas import tpu as pltpu


# ---------------------------------------------------------------------------
# Kernel: one input tile (tm, D) -> one output tile (tm, 2*D)
#   out[:, :D] = sin(x),  out[:, D:] = cos(x)
# The tile is read from HBM once; both halves of the concat output are written
# directly (no separate concat op, no second pointwise round trip).
# ---------------------------------------------------------------------------
def _sincos_cat_kernel(x_ref, o_ref):
    x = x_ref[...].astype(jnp.float32)      # compute in f32, cast at the store
    d = x.shape[-1]                          # static
    o_ref[:, :d] = jnp.sin(x).astype(o_ref.dtype)
    o_ref[:, d:] = jnp.cos(x).astype(o_ref.dtype)


def _pick_tm(n, d, in_bytes, out_bytes, *, vmem_budget=14 << 20, tm_cap=4096):
    """Largest batch tile whose double-buffered in+out footprint stays within
    a budget that fits the default scoped-VMEM limit on every TPU generation
    (16 MiB on v5e, 32 MiB on v6e/v7x, with headroom)."""
    sub = max(8, 32 // max(1, min(in_bytes, out_bytes)))   # sublane packing unit
    per_row = d * in_bytes + 2 * d * out_bytes             # one row of in + out tile
    tm = max(sub, vmem_budget // (2 * per_row))            # x2: double-buffered
    tm = min(int(tm), tm_cap)
    tm -= tm % sub
    return n if tm >= n else tm


def sin_nn_forward(x, *, tm=None):
    """Pallas equivalent of sinNN.forward: concat(sin(x), cos(x), dim=1)."""
    n, d = x.shape
    out_dtype = x.dtype
    in_bytes = jnp.dtype(x.dtype).itemsize
    out_bytes = jnp.dtype(out_dtype).itemsize

    if tm is None:
        tm = _pick_tm(n, d, in_bytes, out_bytes)
    # Legalize a user-provided tile: either the full batch, or a multiple of 8.
    if tm >= n:
        tm = n
    elif tm % 8 != 0:
        tm = max(8, (tm // 8) * 8)
        tm = min(tm, n)

    elems = n * d
    cost = pl.CostEstimate(
        flops=0,
        transcendentals=2 * elems,
        bytes_accessed=elems * in_bytes + 2 * elems * out_bytes,
    )

    return pl.pallas_call(
        _sincos_cat_kernel,
        out_shape=jax.ShapeDtypeStruct((n, 2 * d), out_dtype),
        grid=(pl.cdiv(n, tm),),
        in_specs=[pl.BlockSpec((tm, d), lambda i: (i, 0))],
        out_specs=pl.BlockSpec((tm, 2 * d), lambda i: (i, 0)),
        compiler_params=pltpu.CompilerParams(
            # "parallel" lets the packer shard the batch grid across the two
            # TensorCores on v7x; measured ~0% cost on single-TC v5e/v6e.
            dimension_semantics=("parallel",),
            vmem_limit_bytes=32 << 20,
        ),
        cost_estimate=cost,
    )(x)


# ---------------------------------------------------------------------------
if __name__ == "__main__":
    key = jax.random.PRNGKey(0)
    k1, k2, k3 = jax.random.split(key, 3)

    # Small (batch, input_size) shape consistent with sinNN usage.
    x1 = jax.random.normal(k1, (16, 128), jnp.float32)
    o1 = jax.block_until_ready(sin_nn_forward(x1))
    r1 = jnp.concatenate([jnp.sin(x1), jnp.cos(x1)], axis=1)
    assert o1.shape == (16, 256), o1.shape
    assert bool(jnp.allclose(o1, r1, atol=1e-6, rtol=1e-6))

    # Unaligned batch (200) + non-128 feature dim (96), with a forced small
    # tile so the grid has a partial last block — exercises the cdiv path that
    # replaced the old whole-array-in-VMEM fallback.
    x2 = jax.random.normal(k2, (200, 96), jnp.float32)
    o2 = jax.block_until_ready(sin_nn_forward(x2, tm=64))
    r2 = jnp.concatenate([jnp.sin(x2), jnp.cos(x2)], axis=1)
    assert o2.shape == (200, 192), o2.shape
    assert bool(jnp.allclose(o2, r2, atol=1e-6, rtol=1e-6))

    # bf16 storage: compute happens in f32 in-kernel, cast only at the store.
    x3 = jax.random.normal(k3, (32, 128), jnp.float32).astype(jnp.bfloat16)
    o3 = jax.block_until_ready(sin_nn_forward(x3))
    x3f = x3.astype(jnp.float32)
    r3 = jnp.concatenate([jnp.sin(x3f), jnp.cos(x3f)], axis=1).astype(jnp.bfloat16)
    assert o3.shape == (32, 256), o3.shape
    assert bool(jnp.allclose(o3.astype(jnp.float32), r3.astype(jnp.float32),
                             atol=2e-2, rtol=2e-2))

    assert bool(jnp.all(jnp.isfinite(o1)))
    assert bool(jnp.all(jnp.isfinite(o2)))
    assert bool(jnp.all(jnp.isfinite(o3.astype(jnp.float32))))
    print("KERNEL_OK")
</pallas_src>

<mosaic_0001>
module attributes {stable_mosaic.version = 11 : i64} {
  func.func @_sincos_cat_kernel(%arg0: i32, %arg1: memref<16x128xf32, #tpu.memory_space<vmem>>, %arg2: memref<16x256xf32, #tpu.memory_space<vmem>>) attributes {dimension_semantics = [#tpu.dimension_semantics<parallel>], iteration_bounds = array<i64: 1>, scalar_prefetch = 0 : i64, scratch_operands = 0 : i64, tpu.core_type = #tpu.core_type<tc>, window_params = [{transform_indices = @transform_0, window_bounds = array<i64: 16, 128>}, {transform_indices = @transform_1, window_bounds = array<i64: 16, 256>}]} {
    %c0 = arith.constant 0 : index
    %c0_0 = arith.constant 0 : index
    %0 = vector.load %arg1[%c0, %c0_0] : memref<16x128xf32, #tpu.memory_space<vmem>>, vector<16x128xf32>
    %1 = math.sin %0 : vector<16x128xf32>
    %c0_1 = arith.constant 0 : index
    %c0_2 = arith.constant 0 : index
    %2 = vector.load %arg2[%c0_1, %c0_2] : memref<16x256xf32, #tpu.memory_space<vmem>>, vector<16x128xf32>
    tpu.vector_store %arg2[%c0_1, %c0_2], %1 {strides = array<i32>} : memref<16x256xf32, #tpu.memory_space<vmem>>, vector<16x128xf32>,
    %3 = math.cos %0 : vector<16x128xf32>
    %c0_3 = arith.constant 0 : index
    %c128 = arith.constant 128 : index
    %4 = vector.load %arg2[%c0_3, %c128] : memref<16x256xf32, #tpu.memory_space<vmem>>, vector<16x128xf32>
    tpu.vector_store %arg2[%c0_3, %c128], %3 {strides = array<i32>} : memref<16x256xf32, #tpu.memory_space<vmem>>, vector<16x128xf32>,
    return
  }
  func.func @transform_0(%arg0: i32) -> (i32, i32) {
    %c0_i32 = arith.constant 0 : i32
    %c0_i32_0 = arith.constant 0 : i32
    return %arg0, %c0_i32 : i32, i32
  }
  func.func @transform_1(%arg0: i32) -> (i32, i32) {
    %c0_i32 = arith.constant 0 : i32
    %c0_i32_0 = arith.constant 0 : i32
    return %arg0, %c0_i32 : i32, i32
  }
}

</mosaic_0001>

<llo_original>
// kernel: tpu_custom_call.1
$region0: #{tpu_custom_call.1}
  #allocation0 [shape = 'u32[]', space=smem, size = 0x4, offset = 0x4, fixed_abs, tag = 'smem constant byte address 0x4 - core index']
  #allocation1 [shape = 'u32[144,128]{1,0:T(1,128)}', space=vmem, size = 0x12000, scoped, tag = 'internal scratch']
  %s0 = inlined_call_operand.hbm [shape: f32[16,128], index: 0, kind: input, shape index: {}]
  %s1 = inlined_call_operand.hbm [shape: f32[16,256], index: 1, kind: output, shape index: {}]
  %s2 = sld [smem:[#allocation0]]
  $region18: #{tpu_custom_call.1} parent=0
    _
  %s4 = ssub.s32 1, %s2
  %s5 = scalar_select 0, %s4, %s2
  $region1: #{tpu_custom_call.1} parent=0
    #allocation2 [shape = 'u8[8192]{0}', space=vmem, size = 0x2000, scoped, tag = 'input window, operand 0, single buffered']
    #allocation3 [shape = 's32[1]{0}', space=sflag, size = 0x4, scoped, tag = 'scoped memory for tpu_custom_call.1']
    #allocation4 [shape = 's32[1]{0}', space=sflag, size = 0x4, scoped, tag = 'scoped memory for tpu_custom_call.1']
    #allocation5 [shape = 'u8[16384]{0}', space=vmem, size = 0x4000, scoped, tag = 'output window, operand 0, single buffered']
    %6 = vsyncpa [#allocation3], 0
    %7 = vsyncpa [#allocation4], 0
    // Predicated region
    $region2: #{tpu_custom_call.1} parent=1 // pred_check
      _
    $region3: #{tpu_custom_call.1} parent=1 // pred_check_branch
      %9 = sbr.rel (0) target = $region5
    $region4: #{tpu_custom_call.1} parent=1 // pred_region
      %s11 = ssub.s32 256, 256
      %12 = vsyncadd [#allocation3], %s11
      %s13 = sshll.u32 [#allocation2], 4
      %s14 = int_to_ptr.vmem [resolvable:$true] %s13
      %19 = dma.hbm_to_vmem [thread:$0]  %s0, 256, %s14, [#allocation3], 128, 128, 8
    $region5: #{tpu_custom_call.1} parent=1 // pred_fallthru
      _
    // Predicated region
    $region6: #{tpu_custom_call.1} parent=1 // pred_check
      _
    $region7: #{tpu_custom_call.1} parent=1 // pred_check_branch
      %21 = sbr.rel (0) target = $region9
    $region8: #{tpu_custom_call.1} parent=1 // pred_region
      %22 = dma.done [#allocation3], 256
    $region9: #{tpu_custom_call.1} parent=1 // pred_fallthru
      _
    %v23 = vld [vmem:[#allocation2] sm:$0xff]
    %v24 = vld [vmem:[#allocation2 + $0x8] sm:$0xff]
    %v25 = vand.u32 2147483647, %v23
    %vm26 = vcmp.le.f32.partialorder %v25, 0.7853982
    %vm27 = vcmp.lt.s32.totalorder %v23, 0
    %v28 = vand.u32 %v23, 2139095040
    %v29 = vshrl.u32 %v28, 23
    %v30 = vsub.s32 %v29, 127
    %v31 = vand.u32 2147483647, %v23
    %v32 = vand.u32 %v31, 8388607
    %v33 = vor.u32 %v32, 8388608
    %v34 = vsub.s32 0, %v33
    %v35 = vadd.s32 %v30, 1
    %vm36 = vcmp.gt.s32.totalorder %v35, 0
    %v37 = vsel %vm36, %v35, 0
    %v38 = vshrl.u32 %v37, 5
    %v39 = vand.u32 %v37, 31
    %v40 = vsub.s32 32, %v39
    %v41 = vshrl.u32 683565275, %v40
    %v42 = vshll.u32 683565275, %v39
    %v43 = vshrl.u32 2475754826, %v40
    %v44 = vor.u32 %v42, %v43
    %v45 = vshll.u32 2475754826, %v39
    %v46 = vshrl.u32 2131351028, %v40
    %v47 = vor.u32 %v45, %v46
    %v48 = vshll.u32 2131351028, %v39
    %v49 = vshrl.u32 2102212464, %v40
    %v50 = vor.u32 %v48, %v49
    %v51 = vshll.u32 2102212464, %v39
    %v52 = vshrl.u32 920167782, %v40
    %v53 = vor.u32 %v51, %v52
    %v54 = vshll.u32 920167782, %v39
    %v55 = vshrl.u32 1326507024, %v40
    %v56 = vor.u32 %v54, %v55
    %vm57 = vcmp.lt.s32.totalorder %v38, 1
    %vm58 = vcmp.lt.s32.totalorder %v38, 2
    %vm59 = vcmp.lt.s32.totalorder %v38, 3
    %vm60 = vcmp.lt.s32.totalorder %v38, 4
    %v61 = vsel %vm57, %v41, %v44
    %v62 = vsel %vm60, %v50, 2102212464
    %v63 = vsel %vm59, %v47, %v62
    %v64 = vsel %vm58, %v61, %v63
    %v65 = vsel %vm57, %v44, %v47
    %v66 = vsel %vm60, %v53, 920167782
    %v67 = vsel %vm59, %v50, %v66
    %v68 = vsel %vm58, %v65, %v67
    %v69 = vsel %vm57, %v47, %v50
    %v70 = vsel %vm60, %v56, 1326507024
    %v71 = vsel %vm59, %v53, %v70
    %v72 = vsel %vm58, %v69, %v71
    %v73 = vshll.u32 %v33, 8
    %v74 = vmul.u32.u64.compose %v73, %v72
    %v75 = vextract.low.u32 %v74
    %v76 = vextract.high.u32 %v74
    %v77 = vmul.u32.u64.compose %v73, %v68
    %v78 = vextract.low.u32 %v77
    %v79 = vextract.high.u32 %v77
    %v80 = vmul.u32 %v73, %v64
    %v81 = vadd.s32 %v76, %v78
    %vm82 = vc.u32 %v76, %v78
    %v83 = vadd.s32 %v79, 1
    %v84 = vsel %vm82, %v83, %v79
    %v85 = vadd.s32 %v80, %v84
    %v86 = vadd.s32 %v85, 536870912
    %v87 = vshrl.u32 %v86, 30
    %v88 = vshll.u32 %v87, 30
    %v89 = vsub.s32 %v85, %v88
    %vm90 = vcmp.lt.s32.totalorder %v89, 0
    %v91 = vsub.s32 0, %v89
    %v92 = vsel %vm90, %v91, %v89
    %v93 = vclz %v92
    %v94 = vsub.s32 %v93, 2
    %vm95 = vcmp.gt.s32.totalorder 0, %v94
    %v96 = vsel %vm95, 0, %v94
    %v97 = vsub.s32 32, %v96
    %v98 = vshll.u32 %v89, %v96
    %v99 = vshrl.u32 %v81, %v97
    %v100 = vor.u32 %v98, %v99
    %v101 = vsub.s32 4294967266, %v96
    %v102 = vadd.s32 %v101, 127
    %v103 = vshll.u32 %v102, 23
    %v104 = vor.u32 4788187, %v103
    %v105 = vand.u32 2147483647, %v104
    %v107 = vcvt.s32.f32 %v100
    %v108 = vmul.f32 %v107, %v105
    %v109 = vxor.u32 %v108, 2147483648
    %v110 = vsel %vm27, %v109, %v108
    %v111 = vsub.s32 4, %v87
    %v112 = vsel %vm27, %v111, %v87
    %v113 = vsel %vm26, %v23, %v110
    %v114 = vsel %vm26, 0, %v112
    %v115 = vcosq.f32.pop %v113
    %v116 = vsinq.f32.pop %v113
    %vm117 = vweird.f32 %v23
    %v118 = vadd.s32 %v114, 3
    %v119 = vand.u32 %v118, 3
    %vm120 = vcmp.lt.s32.totalorder %v119, 2
    %vm121 = vcmp.eq.s32.totalorder %v119, 0
    %v122 = vxor.u32 %v116, 2147483648
    %v123 = vsel %vm121, %v115, %v122
    %vm124 = vcmp.eq.s32.totalorder %v119, 2
    %v125 = vxor.u32 %v115, 2147483648
    %v126 = vsel %vm124, %v125, %v116
    %v127 = vsel %vm120, %v123, %v126
    %v128 = vsel %vm117, nan, %v127
    %v129 = vand.u32 2147483647, %v24
    %vm130 = vcmp.le.f32.partialorder %v129, 0.7853982
    %vm131 = vcmp.lt.s32.totalorder %v24, 0
    %v132 = vand.u32 %v24, 2139095040
    %v133 = vshrl.u32 %v132, 23
    %v134 = vsub.s32 %v133, 127
    %v135 = vand.u32 2147483647, %v24
    %v136 = vand.u32 %v135, 8388607
    %v137 = vor.u32 %v136, 8388608
    %v138 = vsub.s32 0, %v137
    %v139 = vadd.s32 %v134, 1
    %vm140 = vcmp.gt.s32.totalorder %v139, 0
    %v141 = vsel %vm140, %v139, 0
    %v142 = vshrl.u32 %v141, 5
    %v143 = vand.u32 %v141, 31
    %v144 = vsub.s32 32, %v143
    %v145 = vshrl.u32 683565275, %v144
    %v146 = vshll.u32 683565275, %v143
    %v147 = vshrl.u32 2475754826, %v144
    %v148 = vor.u32 %v146, %v147
    %v149 = vshll.u32 2475754826, %v143
    %v150 = vshrl.u32 2131351028, %v144
    %v151 = vor.u32 %v149, %v150
    %v152 = vshll.u32 2131351028, %v143
    %v153 = vshrl.u32 2102212464, %v144
    %v154 = vor.u32 %v152, %v153
    %v155 = vshll.u32 2102212464, %v143
    %v156 = vshrl.u32 920167782, %v144
    %v157 = vor.u32 %v155, %v156
    %v158 = vshll.u32 920167782, %v143
    %v159 = vshrl.u32 1326507024, %v144
    %v160 = vor.u32 %v158, %v159
    %vm161 = vcmp.lt.s32.totalorder %v142, 1
    %vm162 = vcmp.lt.s32.totalorder %v142, 2
    %vm163 = vcmp.lt.s32.totalorder %v142, 3
    %vm164 = vcmp.lt.s32.totalorder %v142, 4
    %v165 = vsel %vm161, %v145, %v148
    %v166 = vsel %vm164, %v154, 2102212464
    %v167 = vsel %vm163, %v151, %v166
    %v168 = vsel %vm162, %v165, %v167
    %v169 = vsel %vm161, %v148, %v151
    %v170 = vsel %vm164, %v157, 920167782
    %v171 = vsel %vm163, %v154, %v170
    %v172 = vsel %vm162, %v169, %v171
    %v173 = vsel %vm161, %v151, %v154
    %v174 = vsel %vm164, %v160, 1326507024
    %v175 = vsel %vm163, %v157, %v174
    %v176 = vsel %vm162, %v173, %v175
    %v177 = vshll.u32 %v137, 8
    %v178 = vmul.u32.u64.compose %v177, %v176
    %v179 = vextract.low.u32 %v178
    %v180 = vextract.high.u32 %v178
    %v181 = vmul.u32.u64.compose %v177, %v172
    %v182 = vextract.low.u32 %v181
    %v183 = vextract.high.u32 %v181
    %v184 = vmul.u32 %v177, %v168
    %v185 = vadd.s32 %v180, %v182
    %vm186 = vc.u32 %v180, %v182
    %v187 = vadd.s32 %v183, 1
    %v188 = vsel %vm186, %v187, %v183
    %v189 = vadd.s32 %v184, %v188
    %v190 = vadd.s32 %v189, 536870912
    %v191 = vshrl.u32 %v190, 30
    %v192 = vshll.u32 %v191, 30
    %v193 = vsub.s32 %v189, %v192
    %vm194 = vcmp.lt.s32.totalorder %v193, 0
    %v195 = vsub.s32 0, %v193
    %v196 = vsel %vm194, %v195, %v193
    %v197 = vclz %v196
    %v198 = vsub.s32 %v197, 2
    %vm199 = vcmp.gt.s32.totalorder 0, %v198
    %v200 = vsel %vm199, 0, %v198
    %v201 = vsub.s32 32, %v200
    %v202 = vshll.u32 %v193, %v200
    %v203 = vshrl.u32 %v185, %v201
    %v204 = vor.u32 %v202, %v203
    %v205 = vsub.s32 4294967266, %v200
    %v206 = vadd.s32 %v205, 127
    %v207 = vshll.u32 %v206, 23
    %v208 = vor.u32 4788187, %v207
    %v209 = vand.u32 2147483647, %v208
    %v211 = vcvt.s32.f32 %v204
    %v212 = vmul.f32 %v211, %v209
    %v213 = vxor.u32 %v212, 2147483648
    %v214 = vsel %vm131, %v213, %v212
    %v215 = vsub.s32 4, %v191
    %v216 = vsel %vm131, %v215, %v191
    %v217 = vsel %vm130, %v24, %v214
    %v218 = vsel %vm130, 0, %v216
    %v219 = vcosq.f32.pop %v217
    %v220 = vsinq.f32.pop %v217
    %vm221 = vweird.f32 %v24
    %v222 = vadd.s32 %v218, 3
    %v223 = vand.u32 %v222, 3
    %vm224 = vcmp.lt.s32.totalorder %v223, 2
    %vm225 = vcmp.eq.s32.totalorder %v223, 0
    %v226 = vxor.u32 %v220, 2147483648
    %v227 = vsel %vm225, %v219, %v226
    %vm228 = vcmp.eq.s32.totalorder %v223, 2
    %v229 = vxor.u32 %v219, 2147483648
    %v230 = vsel %vm228, %v229, %v220
    %v231 = vsel %vm224, %v227, %v230
    %v232 = vsel %vm221, nan, %v231
    %233 = vst [vmem:[#allocation5] sm:$0xff] %v128
    %234 = vst [vmem:[#allocation5 + $0x10] sm:$0xff] %v232
    %v235 = vand.u32 2147483647, %v23
    %vm236 = vcmp.le.f32.partialorder %v235, 0.7853982
    %vm237 = vcmp.lt.s32.totalorder %v23, 0
    %v238 = vand.u32 %v23, 2139095040
    %v239 = vshrl.u32 %v238, 23
    %v240 = vsub.s32 %v239, 127
    %v241 = vand.u32 2147483647, %v23
    %v242 = vand.u32 %v241, 8388607
    %v243 = vor.u32 %v242, 8388608
    %v244 = vsub.s32 0, %v243
    %v245 = vadd.s32 %v240, 1
    %vm246 = vcmp.gt.s32.totalorder %v245, 0
    %v247 = vsel %vm246, %v245, 0
    %v248 = vshrl.u32 %v247, 5
    %v249 = vand.u32 %v247, 31
    %v250 = vsub.s32 32, %v249
    %v251 = vshrl.u32 683565275, %v250
    %v252 = vshll.u32 683565275, %v249
    %v253 = vshrl.u32 2475754826, %v250
    %v254 = vor.u32 %v252, %v253
    %v255 = vshll.u32 2475754826, %v249
    %v256 = vshrl.u32 2131351028, %v250
    %v257 = vor.u32 %v255, %v256
    %v258 = vshll.u32 2131351028, %v249
    %v259 = vshrl.u32 2102212464, %v250
    %v260 = vor.u32 %v258, %v259
    %v261 = vshll.u32 2102212464, %v249
    %v262 = vshrl.u32 920167782, %v250
    %v263 = vor.u32 %v261, %v262
    %v264 = vshll.u32 920167782, %v249
    %v265 = vshrl.u32 1326507024, %v250
    %v266 = vor.u32 %v264, %v265
    %vm267 = vcmp.lt.s32.totalorder %v248, 1
    %vm268 = vcmp.lt.s32.totalorder %v248, 2
    %vm269 = vcmp.lt.s32.totalorder %v248, 3
    %vm270 = vcmp.lt.s32.totalorder %v248, 4
    %v271 = vsel %vm267, %v251, %v254
    %v272 = vsel %vm270, %v260, 2102212464
    %v273 = vsel %vm269, %v257, %v272
    %v274 = vsel %vm268, %v271, %v273
    %v275 = vsel %vm267, %v254, %v257
    %v276 = vsel %vm270, %v263, 920167782
    %v277 = vsel %vm269, %v260, %v276
    %v278 = vsel %vm268, %v275, %v277
    %v279 = vsel %vm267, %v257, %v260
    %v280 = vsel %vm270, %v266, 1326507024
    %v281 = vsel %vm269, %v263, %v280
    %v282 = vsel %vm268, %v279, %v281
    %v283 = vshll.u32 %v243, 8
    %v284 = vmul.u32.u64.compose %v283, %v282
    %v285 = vextract.low.u32 %v284
    %v286 = vextract.high.u32 %v284
    %v287 = vmul.u32.u64.compose %v283, %v278
    %v288 = vextract.low.u32 %v287
    %v289 = vextract.high.u32 %v287
    %v290 = vmul.u32 %v283, %v274
    %v291 = vadd.s32 %v286, %v288
    %vm292 = vc.u32 %v286, %v288
    %v293 = vadd.s32 %v289, 1
    %v294 = vsel %vm292, %v293, %v289
    %v295 = vadd.s32 %v290, %v294
    %v296 = vadd.s32 %v295, 536870912
    %v297 = vshrl.u32 %v296, 30
    %v298 = vshll.u32 %v297, 30
    %v299 = vsub.s32 %v295, %v298
    %vm300 = vcmp.lt.s32.totalorder %v299, 0
    %v301 = vsub.s32 0, %v299
    %v302 = vsel %vm300, %v301, %v299
    %v303 = vclz %v302
    %v304 = vsub.s32 %v303, 2
    %vm305 = vcmp.gt.s32.totalorder 0, %v304
    %v306 = vsel %vm305, 0, %v304
    %v307 = vsub.s32 32, %v306
    %v308 = vshll.u32 %v299, %v306
    %v309 = vshrl.u32 %v291, %v307
    %v310 = vor.u32 %v308, %v309
    %v311 = vsub.s32 4294967266, %v306
    %v312 = vadd.s32 %v311, 127
    %v313 = vshll.u32 %v312, 23
    %v314 = vor.u32 4788187, %v313
    %v315 = vand.u32 2147483647, %v314
    %v317 = vcvt.s32.f32 %v310
    %v318 = vmul.f32 %v317, %v315
    %v319 = vxor.u32 %v318, 2147483648
    %v320 = vsel %vm237, %v319, %v318
    %v321 = vsub.s32 4, %v297
    %v322 = vsel %vm237, %v321, %v297
    %v323 = vsel %vm236, %v23, %v320
    %v324 = vsel %vm236, 0, %v322
    %v325 = vcosq.f32.pop %v323
    %v326 = vsinq.f32.pop %v323
    %vm327 = vweird.f32 %v23
    %v328 = vand.u32 %v324, 3
    %vm329 = vcmp.lt.s32.totalorder %v328, 2
    %vm330 = vcmp.eq.s32.totalorder %v328, 0
    %v331 = vxor.u32 %v326, 2147483648
    %v332 = vsel %vm330, %v325, %v331
    %vm333 = vcmp.eq.s32.totalorder %v328, 2
    %v334 = vxor.u32 %v325, 2147483648
    %v335 = vsel %vm333, %v334, %v326
    %v336 = vsel %vm329, %v332, %v335
    %v337 = vsel %vm327, nan, %v336
    %v338 = vand.u32 2147483647, %v24
    %vm339 = vcmp.le.f32.partialorder %v338, 0.7853982
    %vm340 = vcmp.lt.s32.totalorder %v24, 0
    %v341 = vand.u32 %v24, 2139095040
    %v342 = vshrl.u32 %v341, 23
    %v343 = vsub.s32 %v342, 127
    %v344 = vand.u32 2147483647, %v24
    %v345 = vand.u32 %v344, 8388607
    %v346 = vor.u32 %v345, 8388608
    %v347 = vsub.s32 0, %v346
    %v348 = vadd.s32 %v343, 1
    %vm349 = vcmp.gt.s32.totalorder %v348, 0
    %v350 = vsel %vm349, %v348, 0
    %v351 = vshrl.u32 %v350, 5
    %v352 = vand.u32 %v350, 31
    %v353 = vsub.s32 32, %v352
    %v354 = vshrl.u32 683565275, %v353
    %v355 = vshll.u32 683565275, %v352
    %v356 = vshrl.u32 2475754826, %v353
    %v357 = vor.u32 %v355, %v356
    %v358 = vshll.u32 2475754826, %v352
    %v359 = vshrl.u32 2131351028, %v353
    %v360 = vor.u32 %v358, %v359
    %v361 = vshll.u32 2131351028, %v352
    %v362 = vshrl.u32 2102212464, %v353
    %v363 = vor.u32 %v361, %v362
    %v364 = vshll.u32 2102212464, %v352
    %v365 = vshrl.u32 920167782, %v353
    %v366 = vor.u32 %v364, %v365
    %v367 = vshll.u32 920167782, %v352
    %v368 = vshrl.u32 1326507024, %v353
    %v369 = vor.u32 %v367, %v368
    %vm370 = vcmp.lt.s32.totalorder %v351, 1
    %vm371 = vcmp.lt.s32.totalorder %v351, 2
    %vm372 = vcmp.lt.s32.totalorder %v351, 3
    %vm373 = vcmp.lt.s32.totalorder %v351, 4
    %v374 = vsel %vm370, %v354, %v357
    %v375 = vsel %vm373, %v363, 2102212464
    %v376 = vsel %vm372, %v360, %v375
    %v377 = vsel %vm371, %v374, %v376
    %v378 = vsel %vm370, %v357, %v360
    %v379 = vsel %vm373, %v366, 920167782
    %v380 = vsel %vm372, %v363, %v379
    %v381 = vsel %vm371, %v378, %v380
    %v382 = vsel %vm370, %v360, %v363
    %v383 = vsel %vm373, %v369, 1326507024
    %v384 = vsel %vm372, %v366, %v383
    %v385 = vsel %vm371, %v382, %v384
    %v386 = vshll.u32 %v346, 8
    %v387 = vmul.u32.u64.compose %v386, %v385
    %v388 = vextract.low.u32 %v387
    %v389 = vextract.high.u32 %v387
    %v390 = vmul.u32.u64.compose %v386, %v381
    %v391 = vextract.low.u32 %v390
    %v392 = vextract.high.u32 %v390
    %v393 = vmul.u32 %v386, %v377
    %v394 = vadd.s32 %v389, %v391
    %vm395 = vc.u32 %v389, %v391
    %v396 = vadd.s32 %v392, 1
    %v397 = vsel %vm395, %v396, %v392
    %v398 = vadd.s32 %v393, %v397
    %v399 = vadd.s32 %v398, 536870912
    %v400 = vshrl.u32 %v399, 30
    %v401 = vshll.u32 %v400, 30
    %v402 = vsub.s32 %v398, %v401
    %vm403 = vcmp.lt.s32.totalorder %v402, 0
    %v404 = vsub.s32 0, %v402
    %v405 = vsel %vm403, %v404, %v402
    %v406 = vclz %v405
    %v407 = vsub.s32 %v406, 2
    %vm408 = vcmp.gt.s32.totalorder 0, %v407
    %v409 = vsel %vm408, 0, %v407
    %v410 = vsub.s32 32, %v409
    %v411 = vshll.u32 %v402, %v409
    %v412 = vshrl.u32 %v394, %v410
    %v413 = vor.u32 %v411, %v412
    %v414 = vsub.s32 4294967266, %v409
    %v415 = vadd.s32 %v414, 127
    %v416 = vshll.u32 %v415, 23
    %v417 = vor.u32 4788187, %v416
    %v418 = vand.u32 2147483647, %v417
    %v420 = vcvt.s32.f32 %v413
    %v421 = vmul.f32 %v420, %v418
    %v422 = vxor.u32 %v421, 2147483648
    %v423 = vsel %vm340, %v422, %v421
    %v424 = vsub.s32 4, %v400
    %v425 = vsel %vm340, %v424, %v400
    %v426 = vsel %vm339, %v24, %v423
    %v427 = vsel %vm339, 0, %v425
    %v428 = vcosq.f32.pop %v426
    %v429 = vsinq.f32.pop %v426
    %vm430 = vweird.f32 %v24
    %v431 = vand.u32 %v427, 3
    %vm432 = vcmp.lt.s32.totalorder %v431, 2
    %vm433 = vcmp.eq.s32.totalorder %v431, 0
    %v434 = vxor.u32 %v429, 2147483648
    %v435 = vsel %vm433, %v428, %v434
    %vm436 = vcmp.eq.s32.totalorder %v431, 2
    %v437 = vxor.u32 %v428, 2147483648
    %v438 = vsel %vm436, %v437, %v429
    %v439 = vsel %vm432, %v435, %v438
    %v440 = vsel %vm430, nan, %v439
    %441 = vst [vmem:[#allocation5 + $0x8] sm:$0xff] %v337
    %442 = vst [vmem:[#allocation5 + $0x18] sm:$0xff] %v440
    // Predicated region
    $region10: #{tpu_custom_call.1} parent=1 // pred_check
      _
    $region11: #{tpu_custom_call.1} parent=1 // pred_check_branch
      %444 = sbr.rel (0) target = $region13
    $region12: #{tpu_custom_call.1} parent=1 // pred_region
      %s446 = ssub.s32 512, 512
      %447 = vsyncadd [#allocation4], %s446
      %s448 = sshll.u32 [#allocation5], 4
      %s449 = int_to_ptr.vmem [resolvable:$true] %s448
      %454 = dma.vmem_to_hbm [thread:$0]  %s449, 512, %s1, [#allocation4], 256, 256, 16
    $region13: #{tpu_custom_call.1} parent=1 // pred_fallthru
      _
    // Predicated region
    $region14: #{tpu_custom_call.1} parent=1 // pred_check
      _
    $region15: #{tpu_custom_call.1} parent=1 // pred_check_branch
      %456 = sbr.rel (0) target = $region17
    $region16: #{tpu_custom_call.1} parent=1 // pred_region
      %457 = dma.done [#allocation4], 512
    $region17: #{tpu_custom_call.1} parent=1 // pred_fallthru
      _
    %458 = vsyncpa [#allocation3], 1
    %459 = vsyncpa [#allocation4], 1

</llo_original>
